<compile_context>
chip_gen: v6e
topology: v6e:2x2x1
jax: 0.10.0
libtpu: 0.0.40
codegen_flags: <defaults>
</compile_context>

<pallas_src>
import jax
import jax.numpy as jnp
from jax.experimental import pallas as pl
from jax.experimental.pallas import tpu as pltpu


# ---------------------------------------------------------------------------
# Kernels
# ---------------------------------------------------------------------------
def _matvec_fullrow_kernel(w_ref, x_ref, b_ref, o_ref):
    # w_ref: (tm, size_in)  x_ref: (1, size_in)  b_ref / o_ref: (1, tm)
    acc = jax.lax.dot_general(
        x_ref[...],
        w_ref[...],
        dimension_numbers=(((1,), (1,)), ((), ())),   # contract on size_in
        preferred_element_type=jnp.float32,
    )  # (1, tm)
    o_ref[...] = (acc + b_ref[...]).astype(o_ref.dtype)


def _matvec_ktile_kernel(w_ref, x_ref, b_ref, o_ref):
    # Fallback when size_in is too large for a full-row slab.
    # w_ref: (tm, tk)  x_ref: (1, tk)  b_ref / o_ref: (1, tm)
    k = pl.program_id(1)

    @pl.when(k == 0)
    def _():
        o_ref[...] = b_ref[...]

    o_ref[...] += jax.lax.dot_general(
        x_ref[...],
        w_ref[...],
        dimension_numbers=(((1,), (1,)), ((), ())),
        preferred_element_type=jnp.float32,
    )


# ---------------------------------------------------------------------------
# Tile selection
# ---------------------------------------------------------------------------
_W_TILE_BUDGET_BYTES = 40 << 20   # double-buffered W tiles; safe on v7x (64 MiB)
_DEFAULT_VMEM_LIMIT = 48 << 20    # explicit so v5e's 16 MiB scoped default is lifted


def _pick_tile(total, cap, align=128):
    """Largest t <= cap with total % t == 0 and t % align == 0; else `total`."""
    if total <= cap:
        return total
    t = (min(cap, total) // align) * align
    while t >= align:
        if total % t == 0:
            return t
        t -= align
    return total  # no aligned divisor under the cap; use the full extent


# ---------------------------------------------------------------------------
# Wrapper
# ---------------------------------------------------------------------------
def occlusion_fourth_layer(weights, bias, x, *, tm=None, tk=None,
                           vmem_limit_bytes=_DEFAULT_VMEM_LIMIT):
    """y = weights @ x + bias computed in a Pallas TPU kernel.

    weights: (size_out, size_in) f32
    bias   : (size_out,)         f32
    x      : (size_in,)          f32
    returns: (size_out,)         f32
    """
    size_out, size_in = weights.shape
    assert bias.shape == (size_out,)
    assert x.shape == (size_in,)

    bytes_per_elt = weights.dtype.itemsize

    if tm is None:
        # Rows per slab so 2 (double-buffered) W tiles fit the budget; cap at
        # 2048 rows (enough to amortize the ~0.35 us/step grid overhead).
        cap_rows = max(128, _W_TILE_BUDGET_BYTES // (2 * size_in * bytes_per_elt))
        tm = _pick_tile(size_out, min(cap_rows, 2048), align=128)
    if tk is None:
        if tm * size_in * bytes_per_elt * 2 <= _W_TILE_BUDGET_BYTES:
            tk = size_in                       # full-row slab path
        else:
            cap_cols = max(128, _W_TILE_BUDGET_BYTES // (2 * tm * bytes_per_elt))
            tk = _pick_tile(size_in, cap_cols, align=128)

    assert size_out % tm == 0 and size_in % tk == 0

    x_row = x.reshape(1, size_in)
    b_row = bias.reshape(1, size_out).astype(jnp.float32)
    out_shape = jax.ShapeDtypeStruct((1, size_out), jnp.float32)

    if tk == size_in:
        # Single "parallel" grid axis over row slabs; x and bias resident.
        grid_spec = pltpu.PrefetchScalarGridSpec(
            num_scalar_prefetch=0,
            grid=(size_out // tm,),
            in_specs=[
                pl.BlockSpec((tm, size_in), lambda i: (i, 0)),   # W row slab
                pl.BlockSpec((1, size_in), lambda i: (0, 0)),    # x (resident)
                pl.BlockSpec((1, tm), lambda i: (0, i)),         # bias tile
            ],
            out_specs=pl.BlockSpec((1, tm), lambda i: (0, i)),
        )
        kernel = _matvec_fullrow_kernel
        dim_sem = ("parallel",)
    else:
        # Reduction axis last; output block constant along k -> accumulator.
        grid_spec = pltpu.PrefetchScalarGridSpec(
            num_scalar_prefetch=0,
            grid=(size_out // tm, size_in // tk),
            in_specs=[
                pl.BlockSpec((tm, tk), lambda i, k: (i, k)),     # W tile
                pl.BlockSpec((1, tk), lambda i, k: (0, k)),      # x tile
                pl.BlockSpec((1, tm), lambda i, k: (0, i)),      # bias tile
            ],
            out_specs=pl.BlockSpec((1, tm), lambda i, k: (0, i)),
        )
        kernel = _matvec_ktile_kernel
        dim_sem = ("parallel", "arbitrary")

    out = pl.pallas_call(
        kernel,
        out_shape=out_shape,
        grid_spec=grid_spec,
        compiler_params=pltpu.CompilerParams(
            dimension_semantics=dim_sem,
            vmem_limit_bytes=vmem_limit_bytes,
        ),
    )(weights, x_row, b_row)

    return out.reshape(size_out)


# ---------------------------------------------------------------------------
# Parameter construction (exact, vectorized mirror of the PyTorch __init__)
# ---------------------------------------------------------------------------
def init_weights_bias(size_in, size_out):
    assert size_out % 2 == 0 and size_in % 2 == 0
    block_size = size_out // 2
    half_in = size_in // 2
    j = jnp.arange(half_in)
    weights = jnp.zeros((size_out, size_in), dtype=jnp.float32)
    for part in (0, 1):  # the PyTorch outer loop over i only contributes via part
        rows = part * block_size + (j % block_size)
        cols = part * half_in + j
        weights = weights.at[rows, cols].set(1.0)
    bias = jnp.zeros((size_out,), dtype=jnp.float32)
    return weights, bias


if __name__ == "__main__":
    key = jax.random.PRNGKey(0)

    # Small, TPU-friendly sizes consistent with the module (flat size_in -> size_out).
    size_in = 512
    size_out = 512

    weights, bias = init_weights_bias(size_in, size_out)
    x = jax.random.normal(key, (size_in,), dtype=jnp.float32)

    # tm=128 forces a multi-block grid even at this small size so the row-slab
    # tiling path is exercised; the auto-chooser would pick tm=size_out here.
    y = occlusion_fourth_layer(weights, bias, x, tm=128)
    y = jax.block_until_ready(y)

    # Reference check (plain JAX) of the exact PyTorch forward semantics.
    y_ref = weights @ x + bias
    assert y.shape == (size_out,)
    assert jnp.allclose(y, y_ref, atol=1e-4, rtol=1e-5), float(
        jnp.max(jnp.abs(y - y_ref))
    )

    print("KERNEL_OK")
</pallas_src>

<mosaic_0001>
module attributes {stable_mosaic.version = 11 : i64} {
  func.func @_matvec_fullrow_kernel(%arg0: i32, %arg1: memref<128x512xf32, #tpu.memory_space<vmem>>, %arg2: memref<1x512xf32, #tpu.memory_space<vmem>>, %arg3: memref<1x128xf32, #tpu.memory_space<vmem>>, %arg4: memref<1x128xf32, #tpu.memory_space<vmem>>) attributes {dimension_semantics = [#tpu.dimension_semantics<parallel>], iteration_bounds = array<i64: 4>, scalar_prefetch = 0 : i64, scratch_operands = 0 : i64, tpu.core_type = #tpu.core_type<tc>, window_params = [{transform_indices = @transform_0, window_bounds = array<i64: 128, 512>}, {pipeline_mode = #tpu.pipeline_mode<synchronous>, transform_indices = @transform_1, window_bounds = array<i64: 1, 512>}, {transform_indices = @transform_2, window_bounds = array<i64: 1, 128>}, {transform_indices = @transform_3, window_bounds = array<i64: 1, 128>}]} {
    %c0 = arith.constant 0 : index
    %c0_0 = arith.constant 0 : index
    %0 = vector.load %arg2[%c0, %c0_0] : memref<1x512xf32, #tpu.memory_space<vmem>>, vector<1x512xf32>
    %c0_1 = arith.constant 0 : index
    %c0_2 = arith.constant 0 : index
    %1 = vector.load %arg1[%c0_1, %c0_2] : memref<128x512xf32, #tpu.memory_space<vmem>>, vector<128x512xf32>
    %cst = arith.constant dense<0.000000e+00> : vector<1x128xf32>
    %2 = tpu.matmul %0, %1, %cst {dimension_numbers = #tpu.dot_dimension_numbers<[1], [1], [0], [0], [0, 0, 1, 0], [], []>} : vector<1x512xf32>, vector<128x512xf32>, vector<1x128xf32> -> vector<1x128xf32>
    %c0_3 = arith.constant 0 : index
    %c0_4 = arith.constant 0 : index
    %3 = vector.load %arg3[%c0_3, %c0_4] : memref<1x128xf32, #tpu.memory_space<vmem>>, vector<1x128xf32>
    %4 = arith.addf %2, %3 : vector<1x128xf32>
    %c0_5 = arith.constant 0 : index
    %c0_6 = arith.constant 0 : index
    %5 = vector.load %arg4[%c0_5, %c0_6] : memref<1x128xf32, #tpu.memory_space<vmem>>, vector<1x128xf32>
    tpu.vector_store %arg4[%c0_5, %c0_6], %4 {strides = array<i32>} : memref<1x128xf32, #tpu.memory_space<vmem>>, vector<1x128xf32>,
    return
  }
  func.func @transform_0(%arg0: i32) -> (i32, i32) {
    %c0_i32 = arith.constant 0 : i32
    %c0_i32_0 = arith.constant 0 : i32
    return %arg0, %c0_i32 : i32, i32
  }
  func.func @transform_1(%arg0: i32) -> (i32, i32) {
    %c0_i32 = arith.constant 0 : i32
    %c0_i32_0 = arith.constant 0 : i32
    %c0_i32_1 = arith.constant 0 : i32
    return %c0_i32, %c0_i32_0 : i32, i32
  }
  func.func @transform_2(%arg0: i32) -> (i32, i32) {
    %c0_i32 = arith.constant 0 : i32
    %c0_i32_0 = arith.constant 0 : i32
    return %c0_i32, %arg0 : i32, i32
  }
  func.func @transform_3(%arg0: i32) -> (i32, i32) {
    %c0_i32 = arith.constant 0 : i32
    %c0_i32_0 = arith.constant 0 : i32
    return %c0_i32, %arg0 : i32, i32
  }
}

</mosaic_0001>

<llo_original>
// kernel: tpu_custom_call.1
$region0: #{tpu_custom_call.1}
  #allocation0 [shape = 'u32[]', space=smem, size = 0x4, offset = 0x4, fixed_abs, tag = 'smem constant byte address 0x4 - core index']
  #allocation1 [shape = 'u32[144,128]{1,0:T(1,128)}', space=vmem, size = 0x12000, scoped, tag = 'internal scratch']
  %s0 = inlined_call_operand.hbm [shape: f32[512,512], index: 0, kind: input, shape index: {}]
  %s1 = inlined_call_operand.hbm [shape: f32[1,512], index: 1, kind: input, shape index: {}]
  %s2 = inlined_call_operand.hbm [shape: f32[1,512], index: 2, kind: input, shape index: {}]
  %s3 = inlined_call_operand.hbm [shape: f32[1,512], index: 3, kind: output, shape index: {}]
  %s4 = sld [smem:[#allocation0]]
  $region57: #{tpu_custom_call.1} parent=0
    _
  %s6 = ssub.s32 1, %s4
  %s7 = scalar_select 0, %s6, %s4
  $region1: #{tpu_custom_call.1} parent=0
    #allocation2 [shape = 'u8[524288]{0}', space=vmem, size = 0x80000, scoped, tag = 'input window, operand 0']
    #allocation3 [shape = 's32[2]{0}', space=sflag, size = 0x8, scoped, tag = 'scoped memory for tpu_custom_call.1']
    #allocation4 [shape = 's32[2]{0}', space=sflag, size = 0x8, scoped, tag = 'scoped memory for tpu_custom_call.1']
    #allocation5 [shape = 'u8[2048]{0}', space=vmem, size = 0x800, scoped, tag = 'input window, operand 1, single buffered']
    #allocation6 [shape = 's32[1]{0}', space=sflag, size = 0x4, scoped, tag = 'scoped memory for tpu_custom_call.1']
    #allocation7 [shape = 'u8[1024]{0}', space=vmem, size = 0x400, scoped, tag = 'input window, operand 2']
    #allocation8 [shape = 'u8[1024]{0}', space=vmem, size = 0x400, scoped, tag = 'output window, operand 0']
    %8 = vsyncpa [#allocation3], 0
    %s9 = scalar_lea.sflag [#allocation3], 1
    %10 = vsyncpa %s9, 0
    %11 = vsyncpa [#allocation6], 0
    %12 = vsyncpa [#allocation4], 0
    %s13 = scalar_lea.sflag [#allocation4], 1
    %14 = vsyncpa %s13, 0
    loop: start=0, step=1, limit=6
    $region2: #{tpu_custom_call.1} parent=1 // loop_pre_header
      _
    $region3: #{tpu_custom_call.1} parent=1 // loop_header
      %s16 = sphi 0, %s20
      %p17 = scmp.ge.s32.totalorder %s16, 6
      %s26 = sphi 0, %s28
      %s29 = sphi 0, %s26
      %s30 = sphi 0, %s29
      %s46 = sphi 0, %s30
      %s50 = sphi 0, %s50
      %s52 = sphi 0, %s50
      %s53 = sphi 0, %s52
      %s67 = sphi 0, %s53
      %s73 = sphi 0, %s75
      %s76 = sphi 0, %s73
      %s77 = sphi 0, %s76
      %s93 = sphi 0, %s77
      %s99 = sphi 0, %s101
      %s102 = sphi 0, %s99
      %s103 = sphi 0, %s102
      %s119 = sphi 0, %s103
    $region4: #{tpu_custom_call.1} parent=1 // loop_header_branch
      %19 = sbr.rel (%p17) target = $region8
    $region5: #{tpu_custom_call.1} parent=1 // loop_body
      %s21 = ssub.s32 %s16, 1
      %s22 = ssub.s32 %s16, 2
      %s23 = sadd.s32 %s16, 1
      %s24 = ssub.s32 %s16, %s23
      %p25 = scmp.eq.s32.totalorder %s24, 0
      %s27 = sadd.s32 %s26, 1
      %s28 = scalar_select %p25, %s26, %s27
      %p31 = pneg %p25
      %p32 = scmp.eq.s32.totalorder %s16, 3
      %p33 = por %p31, %p32
      %p34 = scmp.ne.s32.totalorder %s26, %s29
      %p35 = scmp.eq.s32.totalorder %s16, 0
      %p36 = por %p34, %p35
      %p37 = scmp.ne.s32.totalorder %s26, %s29
      %p38 = scmp.eq.s32.totalorder %s21, 3
      %p39 = por %p37, %p38
      %p40 = scmp.ne.s32.totalorder %s29, %s30
      %p41 = scmp.eq.s32.totalorder %s21, 0
      %p42 = por %p40, %p41
      %p43 = scmp.ne.s32.totalorder %s29, %s30
      %p44 = scmp.eq.s32.totalorder %s22, 3
      %p45 = por %p43, %p44
      %p47 = scmp.ne.s32.totalorder %s30, %s46
      %p48 = scmp.eq.s32.totalorder %s22, 0
      %p49 = por %p47, %p48
      %s51 = sadd.s32 %s50, 1
      %p54 = scmp.eq.s32.totalorder %s16, 3
      %p55 = scmp.ne.s32.totalorder %s50, %s52
      %p56 = scmp.eq.s32.totalorder %s16, 0
      %p57 = por %p55, %p56
      %p58 = scmp.ne.s32.totalorder %s50, %s52
      %p59 = scmp.eq.s32.totalorder %s21, 3
      %p60 = por %p58, %p59
      %p61 = scmp.ne.s32.totalorder %s52, %s53
      %p62 = scmp.eq.s32.totalorder %s21, 0
      %p63 = por %p61, %p62
      %p64 = scmp.ne.s32.totalorder %s52, %s53
      %p65 = scmp.eq.s32.totalorder %s22, 3
      %p66 = por %p64, %p65
      %p68 = scmp.ne.s32.totalorder %s53, %s67
      %p69 = scmp.eq.s32.totalorder %s22, 0
      %p70 = por %p68, %p69
      %s71 = ssub.s32 %s16, %s23
      %p72 = scmp.eq.s32.totalorder %s71, 0
      %s74 = sadd.s32 %s73, 1
      %s75 = scalar_select %p72, %s73, %s74
      %p78 = pneg %p72
      %p79 = scmp.eq.s32.totalorder %s16, 3
      %p80 = por %p78, %p79
      %p81 = scmp.ne.s32.totalorder %s73, %s76
      %p82 = scmp.eq.s32.totalorder %s16, 0
      %p83 = por %p81, %p82
      %p84 = scmp.ne.s32.totalorder %s73, %s76
      %p85 = scmp.eq.s32.totalorder %s21, 3
      %p86 = por %p84, %p85
      %p87 = scmp.ne.s32.totalorder %s76, %s77
      %p88 = scmp.eq.s32.totalorder %s21, 0
      %p89 = por %p87, %p88
      %p90 = scmp.ne.s32.totalorder %s76, %s77
      %p91 = scmp.eq.s32.totalorder %s22, 3
      %p92 = por %p90, %p91
      %p94 = scmp.ne.s32.totalorder %s77, %s93
      %p95 = scmp.eq.s32.totalorder %s22, 0
      %p96 = por %p94, %p95
      %s97 = ssub.s32 %s16, %s23
      %p98 = scmp.eq.s32.totalorder %s97, 0
      %s100 = sadd.s32 %s99, 1
      %s101 = scalar_select %p98, %s99, %s100
      %p104 = pneg %p98
      %p105 = scmp.eq.s32.totalorder %s16, 3
      %p106 = por %p104, %p105
      %p107 = scmp.ne.s32.totalorder %s99, %s102
      %p108 = scmp.eq.s32.totalorder %s16, 0
      %p109 = por %p107, %p108
      %p110 = scmp.ne.s32.totalorder %s99, %s102
      %p111 = scmp.eq.s32.totalorder %s21, 3
      %p112 = por %p110, %p111
      %p113 = scmp.ne.s32.totalorder %s102, %s103
      %p114 = scmp.eq.s32.totalorder %s21, 0
      %p115 = por %p113, %p114
      %p116 = scmp.ne.s32.totalorder %s102, %s103
      %p117 = scmp.eq.s32.totalorder %s22, 3
      %p118 = por %p116, %p117
      %p120 = scmp.ne.s32.totalorder %s103, %s119
      %p121 = scmp.eq.s32.totalorder %s22, 0
      %p122 = por %p120, %p121
      %p123 = scmp.le.s32.totalorder 1, %s16
      %p124 = scmp.lt.s32.totalorder %s16, 5
      %p125 = pnand %p123, %p124
      %p126 = pneg %p125
      // Predicated region
      $region9: #{tpu_custom_call.1} parent=5 // pred_check
        _
      $region10: #{tpu_custom_call.1} parent=5 // pred_check_branch
        %128 = sbr.rel (%p125) target = $region12
      $region11: #{tpu_custom_call.1} parent=5 // pred_region
        %s129 = ssub.s32 %s16, 1
        // Predicated region
        $region13: #{tpu_custom_call.1} parent=11 // pred_check
          %p130 = pneg %p63
        $region14: #{tpu_custom_call.1} parent=11 // pred_check_branch
          %132 = sbr.rel (%p130) target = $region16
        $region15: #{tpu_custom_call.1} parent=11 // pred_region
          %s134 = ssub.s32 64, 64
          %135 = vsyncadd [#allocation6], %s134
          %s137 = sshll.u32 [#allocation5], 4
          %s138 = int_to_ptr.vmem [resolvable:$true] %s137
          %140 = dma.hbm_to_vmem [thread:$0]  %s1, 64, %s138, [#allocation6]
        $region16: #{tpu_custom_call.1} parent=11 // pred_fallthru
          _
      $region12: #{tpu_custom_call.1} parent=5 // pred_fallthru
        _
      %p141 = scmp.lt.s32.totalorder %s16, 4
      // Predicated region
      $region17: #{tpu_custom_call.1} parent=5 // pred_check
        %p142 = pneg %p141
      $region18: #{tpu_custom_call.1} parent=5 // pred_check_branch
        %144 = sbr.rel (%p142) target = $region20
      $region19: #{tpu_custom_call.1} parent=5 // pred_region
        // Predicated region
        $region21: #{tpu_custom_call.1} parent=19 // pred_check
          %p145 = pneg %p36
        $region22: #{tpu_custom_call.1} parent=19 // pred_check_branch
          %147 = sbr.rel (%p145) target = $region24
        $region23: #{tpu_custom_call.1} parent=19 // pred_region
          %s148 = sand.u32 %s16, 1
          %s149 = scalar_lea.sflag [#allocation3], %s148
          %s150 = sand.u32 %s26, 1
          %s151 = smul.addr %s150, 512
          %s152 = scalar_lea.vmem [#allocation2], %s151
          %s153 = smul.u32 16, %s16
          %s155 = ssub.s32 8192, 8192
          %156 = vsyncadd %s149, %s155
          %s157 = smul.addr %s153, 4
          %s158 = smul.addr %s157, 128
          %s159 = scalar_lea.hbm %s0, %s158
          %s160 = sshll.u32 %s152, 4
          %s161 = int_to_ptr.vmem [resolvable:$true] %s160
          %166 = dma.hbm_to_vmem [thread:$0]  %s159, 8192, %s161, %s149, 512, 512, 32
        $region24: #{tpu_custom_call.1} parent=19 // pred_fallthru
          _
        // Predicated region
        $region25: #{tpu_custom_call.1} parent=19 // pred_check
          %p167 = pneg %p83
        $region26: #{tpu_custom_call.1} parent=19 // pred_check_branch
          %169 = sbr.rel (%p167) target = $region28
        $region27: #{tpu_custom_call.1} parent=19 // pred_region
          %s170 = sand.u32 %s16, 1
          %s171 = scalar_lea.sflag [#allocation3], %s170
          %s172 = sand.u32 %s73, 1
          %s173 = scalar_lea.vmem [#allocation7], %s172
          %s175 = ssub.s32 16, 16
          %176 = vsyncadd %s171, %s175
          %s177 = smul.addr %s16, 16
          %s178 = scalar_lea.hbm %s2, %s177
          %s180 = sshll.u32 %s173, 4
          %s181 = int_to_ptr.vmem [resolvable:$true] %s180
          %183 = dma.hbm_to_vmem [thread:$0]  %s178, 16, %s181, %s171
        $region28: #{tpu_custom_call.1} parent=19 // pred_fallthru
          _
      $region20: #{tpu_custom_call.1} parent=5 // pred_fallthru
        _
      %p184 = scmp.le.s32.totalorder 1, %s16
      %p185 = scmp.lt.s32.totalorder %s16, 5
      %p186 = pnand %p184, %p185
      %p187 = pneg %p186
      // Predicated region
      $region29: #{tpu_custom_call.1} parent=5 // pred_check
        _
      $region30: #{tpu_custom_call.1} parent=5 // pred_check_branch
        %189 = sbr.rel (%p186) target = $region32
      $region31: #{tpu_custom_call.1} parent=5 // pred_region
        %s190 = ssub.s32 %s16, 1
        %s191 = sand.u32 %s21, 1
        %s192 = scalar_lea.sflag [#allocation3], %s191
        %s193 = sand.u32 %s29, 1
        %s194 = smul.addr %s193, 512
        %s195 = scalar_lea.vmem [#allocation2], %s194
        // Predicated region
        $region33: #{tpu_custom_call.1} parent=31 // pred_check
          %p196 = pneg %p42
        $region34: #{tpu_custom_call.1} parent=31 // pred_check_branch
          %198 = sbr.rel (%p196) target = $region36
        $region35: #{tpu_custom_call.1} parent=31 // pred_region
          %199 = dma.done %s192, 8192
        $region36: #{tpu_custom_call.1} parent=31 // pred_fallthru
          _
        // Predicated region
        $region37: #{tpu_custom_call.1} parent=31 // pred_check
          %p200 = pneg %p63
        $region38: #{tpu_custom_call.1} parent=31 // pred_check_branch
          %202 = sbr.rel (%p200) target = $region40
        $region39: #{tpu_custom_call.1} parent=31 // pred_region
          %203 = dma.done [#allocation6], 64
        $region40: #{tpu_custom_call.1} parent=31 // pred_fallthru
          _
        %s204 = sand.u32 %s21, 1
        %s205 = scalar_lea.sflag [#allocation3], %s204
        %s206 = sand.u32 %s76, 1
        %s207 = scalar_lea.vmem [#allocation7], %s206
        // Predicated region
        $region41: #{tpu_custom_call.1} parent=31 // pred_check
          %p208 = pneg %p89
        $region42: #{tpu_custom_call.1} parent=31 // pred_check_branch
          %210 = sbr.rel (%p208) target = $region44
        $region43: #{tpu_custom_call.1} parent=31 // pred_region
          %211 = dma.done %s205, 16
        $region44: #{tpu_custom_call.1} parent=31 // pred_fallthru
          _
        %s212 = sand.u32 %s21, 1
        %s213 = scalar_lea.sflag [#allocation3], %s212
        %s214 = sand.u32 %s29, 1
        %s215 = smul.addr %s214, 512
        %s216 = scalar_lea.vmem [#allocation2], %s215
        %p217 = pneg %p42
        %p218 = pneg %p39
        %p219 = pneg %p63
        %p220 = pneg %p60
        %s221 = sand.u32 %s21, 1
        %s222 = scalar_lea.sflag [#allocation3], %s221
        %s223 = sand.u32 %s76, 1
        %s224 = scalar_lea.vmem [#allocation7], %s223
        %p225 = pneg %p89
        %p226 = pneg %p86
        %p227 = pneg %p115
        %p228 = pneg %p112
        %s229 = sand.u32 %s102, 1
        %s230 = scalar_lea.sflag [#allocation4], %s229
        %s231 = sand.u32 %s102, 1
        %s232 = scalar_lea.vmem [#allocation8], %s231
        %s233 = smul.u32 16, %s21
        %v234 = vld [vmem:[#allocation5] sm:$0xf]
        %v235 = vld [vmem:[%s195] sm:$0xff]
        %v236 = vld [vmem:[%s195 + $0x8] sm:$0xff]
        %v237 = vld [vmem:[%s195 + $0x10] sm:$0xff]
        %v238 = vld [vmem:[%s195 + $0x18] sm:$0xff]
        %v239 = vld [vmem:[%s195 + $0x20] sm:$0xff]
        %v240 = vld [vmem:[%s195 + $0x28] sm:$0xff]
        %v241 = vld [vmem:[%s195 + $0x30] sm:$0xff]
        %v242 = vld [vmem:[%s195 + $0x38] sm:$0xff]
        %v243 = vld [vmem:[%s195 + $0x40] sm:$0xff]
        %v244 = vld [vmem:[%s195 + $0x48] sm:$0xff]
        %v245 = vld [vmem:[%s195 + $0x50] sm:$0xff]
        %v246 = vld [vmem:[%s195 + $0x58] sm:$0xff]
        %v247 = vld [vmem:[%s195 + $0x60] sm:$0xff]
        %v248 = vld [vmem:[%s195 + $0x68] sm:$0xff]
        %v249 = vld [vmem:[%s195 + $0x70] sm:$0xff]
        %v250 = vld [vmem:[%s195 + $0x78] sm:$0xff]
        %v251 = vld [vmem:[%s195 + $0x80] sm:$0xff]
        %v252 = vld [vmem:[%s195 + $0x88] sm:$0xff]
        %v253 = vld [vmem:[%s195 + $0x90] sm:$0xff]
        %v254 = vld [vmem:[%s195 + $0x98] sm:$0xff]
        %v255 = vld [vmem:[%s195 + $0xa0] sm:$0xff]
        %v256 = vld [vmem:[%s195 + $0xa8] sm:$0xff]
        %v257 = vld [vmem:[%s195 + $0xb0] sm:$0xff]
        %v258 = vld [vmem:[%s195 + $0xb8] sm:$0xff]
        %v259 = vld [vmem:[%s195 + $0xc0] sm:$0xff]
        %v260 = vld [vmem:[%s195 + $0xc8] sm:$0xff]
        %v261 = vld [vmem:[%s195 + $0xd0] sm:$0xff]
        %v262 = vld [vmem:[%s195 + $0xd8] sm:$0xff]
        %v263 = vld [vmem:[%s195 + $0xe0] sm:$0xff]
        %v264 = vld [vmem:[%s195 + $0xe8] sm:$0xff]
        %v265 = vld [vmem:[%s195 + $0xf0] sm:$0xff]
        %v266 = vld [vmem:[%s195 + $0xf8] sm:$0xff]
        %v267 = vld [vmem:[%s195 + $0x100] sm:$0xff]
        %v268 = vld [vmem:[%s195 + $0x108] sm:$0xff]
        %v269 = vld [vmem:[%s195 + $0x110] sm:$0xff]
        %v270 = vld [vmem:[%s195 + $0x118] sm:$0xff]
        %v271 = vld [vmem:[%s195 + $0x120] sm:$0xff]
        %v272 = vld [vmem:[%s195 + $0x128] sm:$0xff]
        %v273 = vld [vmem:[%s195 + $0x130] sm:$0xff]
        %v274 = vld [vmem:[%s195 + $0x138] sm:$0xff]
        %v275 = vld [vmem:[%s195 + $0x140] sm:$0xff]
        %v276 = vld [vmem:[%s195 + $0x148] sm:$0xff]
        %v277 = vld [vmem:[%s195 + $0x150] sm:$0xff]
        %v278 = vld [vmem:[%s195 + $0x158] sm:$0xff]
        %v279 = vld [vmem:[%s195 + $0x160] sm:$0xff]
        %v280 = vld [vmem:[%s195 + $0x168] sm:$0xff]
        %v281 = vld [vmem:[%s195 + $0x170] sm:$0xff]
        %v282 = vld [vmem:[%s195 + $0x178] sm:$0xff]
        %v283 = vld [vmem:[%s195 + $0x180] sm:$0xff]
        %v284 = vld [vmem:[%s195 + $0x188] sm:$0xff]
        %v285 = vld [vmem:[%s195 + $0x190] sm:$0xff]
        %v286 = vld [vmem:[%s195 + $0x198] sm:$0xff]
        %v287 = vld [vmem:[%s195 + $0x1a0] sm:$0xff]
        %v288 = vld [vmem:[%s195 + $0x1a8] sm:$0xff]
        %v289 = vld [vmem:[%s195 + $0x1b0] sm:$0xff]
        %v290 = vld [vmem:[%s195 + $0x1b8] sm:$0xff]
        %v291 = vld [vmem:[%s195 + $0x1c0] sm:$0xff]
        %v292 = vld [vmem:[%s195 + $0x1c8] sm:$0xff]
        %v293 = vld [vmem:[%s195 + $0x1d0] sm:$0xff]
        %v294 = vld [vmem:[%s195 + $0x1d8] sm:$0xff]
        %v295 = vld [vmem:[%s195 + $0x1e0] sm:$0xff]
        %v296 = vld [vmem:[%s195 + $0x1e8] sm:$0xff]
        %v297 = vld [vmem:[%s195 + $0x1f0] sm:$0xff]
        %v298 = vld [vmem:[%s195 + $0x1f8] sm:$0xff]
        %v299 = vld [vmem:[%s207] sm:$0x1]
        %v301 = vlaneseq
        %v302 = vshrl.u32 %v301, 7
        %v303 = vsub.s32 0, %v302
        %v304 = vrot.slane %v234, %v303
        %v305 = vlaneseq
        %v306 = vshrl.u32 %v305, 7
        %v307 = vsub.s32 1, %v306
        %v308 = vrot.slane %v234, %v307
        %v309 = vlaneseq
        %v310 = vshrl.u32 %v309, 7
        %v311 = vsub.s32 2, %v310
        %v312 = vrot.slane %v234, %v311
        %v313 = vlaneseq
        %v314 = vshrl.u32 %v313, 7
        %v315 = vsub.s32 3, %v314
        %v316 = vrot.slane %v234, %v315
        %321 = vmatprep.subr.mxu0 %v296
        %322 = vmatpush1.xpose.msra.mxu0 %v295
        %323 = vmatprep.subr.mxu0 %v292
        %324 = vmatpush1.xpose.msra.mxu0 %v291
        %325 = vmatprep.subr.mxu0 %v288
        %326 = vmatpush1.xpose.msra.mxu0 %v287
        %327 = vmatprep.subr.mxu0 %v284
        %328 = vmatpush1.xpose.msra.mxu0 %v283
        %329 = vmatprep.subr.mxu0 %v280
        %330 = vmatpush1.xpose.msra.mxu0 %v279
        %331 = vmatprep.subr.mxu0 %v276
        %332 = vmatpush1.xpose.msra.mxu0 %v275
        %333 = vmatprep.subr.mxu0 %v272
        %334 = vmatpush1.xpose.msra.mxu0 %v271
        %335 = vmatprep.subr.mxu0 %v268
        %336 = vmatpush1.xpose.msra.mxu0 %v267
        %337 = vmatprep.subr.mxu0 %v264
        %338 = vmatpush1.xpose.msra.mxu0 %v263
        %339 = vmatprep.subr.mxu0 %v260
        %340 = vmatpush1.xpose.msra.mxu0 %v259
        %341 = vmatprep.subr.mxu0 %v256
        %342 = vmatpush1.xpose.msra.mxu0 %v255
        %343 = vmatprep.subr.mxu0 %v252
        %344 = vmatpush1.xpose.msra.mxu0 %v251
        %345 = vmatprep.subr.mxu0 %v248
        %346 = vmatpush1.xpose.msra.mxu0 %v247
        %347 = vmatprep.subr.mxu0 %v244
        %348 = vmatpush1.xpose.msra.mxu0 %v243
        %349 = vmatprep.subr.mxu0 %v240
        %350 = vmatpush1.xpose.msra.mxu0 %v239
        %351 = vmatprep.subr.mxu0 %v236
        %352 = vmatpush1.xpose.msra.mxu0 %v235
        %353 = vmatprep.subr.mxu0 0.0
        %354 = vmatpush2.xpose.msra.mxu0 0.0
        %355 = vmatprep.subr.mxu0 0.0
        %356 = vmatpush2.xpose.msra.mxu0 0.0
        %357 = vmatprep.subr.mxu0 0.0
        %358 = vmatpush2.xpose.msra.mxu0 0.0
        %359 = vmatprep.subr.mxu0 0.0
        %360 = vmatpush2.xpose.msra.mxu0 0.0
        %361 = vmatprep.subr.mxu0 0.0
        %362 = vmatpush2.xpose.msra.mxu0 0.0
        %363 = vmatprep.subr.mxu0 0.0
        %364 = vmatpush2.xpose.msra.mxu0 0.0
        %365 = vmatprep.subr.mxu0 0.0
        %366 = vmatpush2.xpose.msra.mxu0 0.0
        %367 = vmatprep.subr.mxu0 0.0
        %368 = vmatpush2.xpose.msra.mxu0 0.0
        %369 = vmatprep.subr.mxu0 0.0
        %370 = vmatpush2.xpose.msra.mxu0 0.0
        %371 = vmatprep.subr.mxu0 0.0
        %372 = vmatpush2.xpose.msra.mxu0 0.0
        %373 = vmatprep.subr.mxu0 0.0
        %374 = vmatpush2.xpose.msra.mxu0 0.0
        %375 = vmatprep.subr.mxu0 0.0
        %376 = vmatpush2.xpose.msra.mxu0 0.0
        %377 = vmatprep.subr.mxu0 0.0
        %378 = vmatpush2.xpose.msra.mxu0 0.0
        %379 = vmatprep.subr.mxu0 0.0
        %380 = vmatpush2.xpose.msra.mxu0 0.0
        %381 = vmatprep.subr.mxu0 0.0
        %382 = vmatpush2.xpose.msra.mxu0 0.0
        %383 = vmatprep.subr.mxu0 0.0
        %384 = vmatpush2.xpose.msra.mxu0 0.0
        %385 = vmatprep.mubr.f32.mxu0 %v308
        %386 = vmatmul.mubr.f32.gmra.mxu0 %v304
        %v387 = vpop.f32.mrf.mxu0
        %v388 = vadd.f32 %v299, %v387
        %v389 = vpop.f32.mrf.mxu0
        %390 = vdwg.mxu0
        %391 = vmatprep.subr.mxu0 %v298
        %392 = vmatpush1.xpose.msra.mxu0 %v297
        %393 = vmatprep.subr.mxu0 %v294
        %394 = vmatpush1.xpose.msra.mxu0 %v293
        %395 = vmatprep.subr.mxu0 %v290
        %396 = vmatpush1.xpose.msra.mxu0 %v289
        %397 = vmatprep.subr.mxu0 %v286
        %398 = vmatpush1.xpose.msra.mxu0 %v285
        %399 = vmatprep.subr.mxu0 %v282
        %400 = vmatpush1.xpose.msra.mxu0 %v281
        %401 = vmatprep.subr.mxu0 %v278
        %402 = vmatpush1.xpose.msra.mxu0 %v277
        %403 = vmatprep.subr.mxu0 %v274
        %404 = vmatpush1.xpose.msra.mxu0 %v273
        %405 = vmatprep.subr.mxu0 %v270
        %406 = vmatpush1.xpose.msra.mxu0 %v269
        %407 = vmatprep.subr.mxu0 %v266
        %408 = vmatpush1.xpose.msra.mxu0 %v265
        %409 = vmatprep.subr.mxu0 %v262
        %410 = vmatpush1.xpose.msra.mxu0 %v261
        %411 = vmatprep.subr.mxu0 %v258
        %412 = vmatpush1.xpose.msra.mxu0 %v257
        %413 = vmatprep.subr.mxu0 %v254
        %414 = vmatpush1.xpose.msra.mxu0 %v253
        %415 = vmatprep.subr.mxu0 %v250
        %416 = vmatpush1.xpose.msra.mxu0 %v249
        %417 = vmatprep.subr.mxu0 %v246
        %418 = vmatpush1.xpose.msra.mxu0 %v245
        %419 = vmatprep.subr.mxu0 %v242
        %420 = vmatpush1.xpose.msra.mxu0 %v241
        %421 = vmatprep.subr.mxu0 %v238
        %422 = vmatpush1.xpose.msra.mxu0 %v237
        %423 = vmatprep.subr.mxu0 0.0
        %424 = vmatpush2.xpose.msra.mxu0 0.0
        %425 = vmatprep.subr.mxu0 0.0
        %426 = vmatpush2.xpose.msra.mxu0 0.0
        %427 = vmatprep.subr.mxu0 0.0
        %428 = vmatpush2.xpose.msra.mxu0 0.0
        %429 = vmatprep.subr.mxu0 0.0
        %430 = vmatpush2.xpose.msra.mxu0 0.0
        %431 = vmatprep.subr.mxu0 0.0
        %432 = vmatpush2.xpose.msra.mxu0 0.0
        %433 = vmatprep.subr.mxu0 0.0
        %434 = vmatpush2.xpose.msra.mxu0 0.0
        %435 = vmatprep.subr.mxu0 0.0
        %436 = vmatpush2.xpose.msra.mxu0 0.0
        %437 = vmatprep.subr.mxu0 0.0
        %438 = vmatpush2.xpose.msra.mxu0 0.0
        %439 = vmatprep.subr.mxu0 0.0
        %440 = vmatpush2.xpose.msra.mxu0 0.0
        %441 = vmatprep.subr.mxu0 0.0
        %442 = vmatpush2.xpose.msra.mxu0 0.0
        %443 = vmatprep.subr.mxu0 0.0
        %444 = vmatpush2.xpose.msra.mxu0 0.0
        %445 = vmatprep.subr.mxu0 0.0
        %446 = vmatpush2.xpose.msra.mxu0 0.0
        %447 = vmatprep.subr.mxu0 0.0
        %448 = vmatpush2.xpose.msra.mxu0 0.0
        %449 = vmatprep.subr.mxu0 0.0
        %450 = vmatpush2.xpose.msra.mxu0 0.0
        %451 = vmatprep.subr.mxu0 0.0
        %452 = vmatpush2.xpose.msra.mxu0 0.0
        %453 = vmatprep.subr.mxu0 0.0
        %454 = vmatpush2.xpose.msra.mxu0 0.0
        %455 = vmatprep.mubr.f32.mxu0 %v316
        %456 = vmatmul.mubr.f32.gmra.mxu0 %v312
        %v457 = vpop.f32.mrf.mxu0
        %v458 = vadd.f32 %v388, %v457
        %v459 = vpop.f32.mrf.mxu0
        %460 = vdwg.mxu0
        %461 = vst [vmem:[%s232] sm:$0x1] %v458
        %s462 = sand.u32 %s102, 1
        %s463 = scalar_lea.sflag [#allocation4], %s462
        %s464 = sand.u32 %s102, 1
        %s465 = scalar_lea.vmem [#allocation8], %s464
        // Predicated region
        $region45: #{tpu_custom_call.1} parent=31 // pred_check
          %p466 = pneg %p112
        $region46: #{tpu_custom_call.1} parent=31 // pred_check_branch
          %468 = sbr.rel (%p466) target = $region48
        $region47: #{tpu_custom_call.1} parent=31 // pred_region
          %s470 = ssub.s32 16, 16
          %471 = vsyncadd %s463, %s470
          %s472 = smul.addr %s21, 16
          %s473 = scalar_lea.hbm %s3, %s472
          %s475 = sshll.u32 %s465, 4
          %s476 = int_to_ptr.vmem [resolvable:$true] %s475
          %478 = dma.vmem_to_hbm [thread:$0]  %s476, 16, %s473, %s463
        $region48: #{tpu_custom_call.1} parent=31 // pred_fallthru
          _
      $region32: #{tpu_custom_call.1} parent=5 // pred_fallthru
        _
      %p479 = scmp.le.s32.totalorder 2, %s16
      // Predicated region
      $region49: #{tpu_custom_call.1} parent=5 // pred_check
        %p480 = pneg %p479
      $region50: #{tpu_custom_call.1} parent=5 // pred_check_branch
        %482 = sbr.rel (%p480) target = $region52
      $region51: #{tpu_custom_call.1} parent=5 // pred_region
        %s483 = ssub.s32 %s16, 2
        // Predicated region
        $region53: #{tpu_custom_call.1} parent=51 // pred_check
          %p484 = pneg %p118
        $region54: #{tpu_custom_call.1} parent=51 // pred_check_branch
          %486 = sbr.rel (%p484) target = $region56
        $region55: #{tpu_custom_call.1} parent=51 // pred_region
          %s487 = sand.u32 %s103, 1
          %s488 = scalar_lea.sflag [#allocation4], %s487
          %s489 = sand.u32 %s103, 1
          %s490 = scalar_lea.vmem [#allocation8], %s489
          %491 = dma.done %s488, 16
        $region56: #{tpu_custom_call.1} parent=51 // pred_fallthru
          _
      $region52: #{tpu_custom_call.1} parent=5 // pred_fallthru
        _
    $region6: #{tpu_custom_call.1} parent=1 // loop_footer
      %s20 = sadd.s32 1, %s16
    $region7: #{tpu_custom_call.1} parent=1 // loop_footer_branch
      %15 = sbr.rel target = $region3
    $region8: #{tpu_custom_call.1} parent=1 // loop_exit
      _
    %492 = vsyncpa [#allocation3], 1
    %s493 = scalar_lea.sflag [#allocation3], 1
    %494 = vsyncpa %s493, 1
    %495 = vsyncpa [#allocation6], 1
    %496 = vsyncpa [#allocation4], 1
    %s497 = scalar_lea.sflag [#allocation4], 1
    %498 = vsyncpa %s497, 1

</llo_original>
